<compile_context>
chip_gen: v7x
topology: tpu7x:2x2x1
jax: 0.10.0
libtpu: 0.0.40
codegen_flags: <defaults>
</compile_context>

<pallas_src>
import functools

import jax
import jax.numpy as jnp
from jax.experimental import pallas as pl
from jax.experimental.pallas import tpu as pltpu


def _round_up(x: int, m: int) -> int:
    return ((x + m - 1) // m) * m


# Per-TensorCore VMEM budget safe on every generation (v7x: 64 MiB/TC; v5e/v6e: 128 MiB).
_VMEM_BUDGET = 44 * 1024 * 1024
_VMEM_CEILING = 60 * 1024 * 1024


def _weights_vmem_bytes(F: int, Hp: int) -> int:
    # Single-buffered resident operands: W1^T (bf16) + W2^T (bf16) + b1/b2 (f32).
    return F * Hp * 2 + Hp * Hp * 2 + 2 * Hp * 4


def _per_row_vmem_bytes(F: int, Hp: int) -> int:
    # 2x f32 x-tile (double-buffered) + in-kernel bf16 x + 2x f32 out-tile
    # + intermediate h in f32 and bf16.
    return 2 * F * 4 + F * 2 + 2 * Hp * 4 + Hp * (4 + 2)


def _choose_row_tile(n: int, F: int, Hp: int) -> int:
    """Largest row tile that fits the VMEM budget; even step counts for megacore."""
    n8 = _round_up(max(n, 8), 8)
    fixed = _weights_vmem_bytes(F, Hp)
    per_row = _per_row_vmem_bytes(F, Hp)
    cap = (_VMEM_BUDGET - fixed) // max(per_row, 1)
    cap = max(16, min(512, (cap // 8) * 8))
    if n8 <= cap:
        return n8  # single grid step covers all rows
    # Even number of steps (feeds both v7x TensorCores evenly), minimal row padding.
    steps = 2
    while _round_up(pl.cdiv(n8, steps), 16) > cap:
        steps += 2
    return _round_up(pl.cdiv(n8, steps), 16)


def fc_kernel(x_ref, w1_ref, b1_ref, w2_ref, b2_ref, o_ref):
    # x arrives f32 (no wrapper pad/cast pass); cast to bf16 in-kernel so the MXU
    # gets bf16 operands while the VPU cast hides under the matmuls.
    x = x_ref[...].astype(jnp.bfloat16)                                # (tm, F)
    h = jnp.dot(x, w1_ref[...], preferred_element_type=jnp.float32)    # MXU, f32 acc
    h = jnp.maximum(h + b1_ref[...], 0.0)                              # relu(fc1(x)), f32
    y = jnp.dot(h.astype(jnp.bfloat16), w2_ref[...],
                preferred_element_type=jnp.float32)                    # MXU, f32 acc
    y = y + b2_ref[...] + h                                            # fc2(h) + residual
    o_ref[...] = jnp.maximum(y, 0.0).astype(o_ref.dtype)               # final relu


@functools.partial(jax.jit, static_argnames=("nhid", "trim"))
def fc_forward(x, w1_t, b1, w2_t, b2, *, nhid, trim=True):
    """x: (N, F) f32.  w1_t: (F, Hp) bf16, w2_t: (Hp, Hp) bf16, b1/b2: (1, Hp) f32."""
    N, F = x.shape
    F_w, Hp = w1_t.shape
    assert F_w == F, "weight/input feature mismatch"

    tm = _choose_row_tile(N, F, Hp)
    Np = _round_up(N, tm)
    if Np != N:
        # Zero row padding only when N is not a tile multiple (exact semantics; the
        # garbage rows it produces are dropped by the final row crop).
        x = jnp.pad(x, ((0, Np - N), (0, 0)))
    grid = (Np // tm,)

    # Grid-invariant operands: index_map is constant, so the default double-buffer's
    # second copy is dead weight -> single-buffer them.
    resident = pl.Buffered(1)

    vmem_usage = _weights_vmem_bytes(F, Hp) + tm * _per_row_vmem_bytes(F, Hp)
    vmem_limit = int(min(_VMEM_CEILING, max(int(vmem_usage * 1.4), 16 * 1024 * 1024)))

    # Advisory cost: real (unpadded) work only.
    H = nhid
    flops = 2 * N * H * (F + H) + 5 * N * H
    bytes_accessed = (N * F * 4 + F * Hp * 2 + Hp * Hp * 2 + 2 * Hp * 4 + N * Hp * 4)

    out = pl.pallas_call(
        fc_kernel,
        out_shape=jax.ShapeDtypeStruct((Np, Hp), jnp.float32),
        grid_spec=pltpu.PrefetchScalarGridSpec(
            num_scalar_prefetch=0,
            grid=grid,
            in_specs=[
                pl.BlockSpec((tm, F), lambda i: (i, 0)),                           # x row tile (f32)
                pl.BlockSpec((F, Hp), lambda i: (0, 0), pipeline_mode=resident),   # W1^T (bf16)
                pl.BlockSpec((1, Hp), lambda i: (0, 0), pipeline_mode=resident),   # b1 (f32)
                pl.BlockSpec((Hp, Hp), lambda i: (0, 0), pipeline_mode=resident),  # W2^T (bf16)
                pl.BlockSpec((1, Hp), lambda i: (0, 0), pipeline_mode=resident),   # b2 (f32)
            ],
            out_specs=pl.BlockSpec((tm, Hp), lambda i: (i, 0)),
        ),
        compiler_params=pltpu.CompilerParams(
            dimension_semantics=("parallel",),
            vmem_limit_bytes=vmem_limit,
        ),
        cost_estimate=pl.CostEstimate(
            flops=flops, transcendentals=0, bytes_accessed=bytes_accessed),
    )(x, w1_t, b1, w2_t, b2)

    # TODO(synk): for very large nhid (Hp*Hp*2B near the VMEM budget) add a second
    # grid axis tiling W2^T along output columns (row axis stays "parallel"); on v7x
    # optionally quantize the resident weights to fp8 with per-channel scales.
    if not trim:
        return out          # keep the padded (Np, Hp) layout for chained layers
    if Np != N or Hp != nhid:
        out = out[:N, :nhid]  # crop only when padding actually happened
    return out


def init_linear_params(key, in_features, out_features, dtype=jnp.float32):
    # Deterministic init mimicking nn.Linear default (uniform +/- 1/sqrt(in)).
    kw, kb = jax.random.split(key)
    bound = 1.0 / jnp.sqrt(jnp.array(in_features, dtype))
    w = jax.random.uniform(kw, (out_features, in_features), dtype, -bound, bound)
    b = jax.random.uniform(kb, (out_features,), dtype, -bound, bound)
    return w, b


def prepare_fc_params(params):
    """One-time prep: transpose, zero-pad hidden dim to a lane-dense (128) multiple,
    cast MXU operands to bf16. F (the contraction dim of fc1) is left unpadded —
    Mosaic handles the K-dim internally and x needs no wrapper-side pad pass."""
    (w1, b1), (w2, b2) = params
    H, F = w1.shape
    Hp = _round_up(H, 128)
    return {
        "w1_t": jnp.pad(jnp.transpose(w1), ((0, 0), (0, Hp - H))).astype(jnp.bfloat16),
        "b1": jnp.pad(b1, (0, Hp - H)).reshape(1, Hp).astype(jnp.float32),
        "w2_t": jnp.pad(jnp.transpose(w2), ((0, Hp - H), (0, Hp - H))).astype(jnp.bfloat16),
        "b2": jnp.pad(b2, (0, Hp - H)).reshape(1, Hp).astype(jnp.float32),
        "nhid": H,
    }


def fc_module_apply(prepared, data):
    """JAX equivalent of FC.forward(data) with the hot path in Pallas."""
    x, adj = data[0], data[1]  # adj is unused by FC.forward, kept for interface parity
    return fc_forward(x, prepared["w1_t"], prepared["b1"],
                      prepared["w2_t"], prepared["b2"], nhid=prepared["nhid"])


if __name__ == "__main__":
    key = jax.random.PRNGKey(0)
    k_x, k_adj, k_fc1, k_fc2 = jax.random.split(key, 4)

    N = 128            # number of nodes
    feature_dim = 32
    nhid = 32

    x = jax.random.normal(k_x, (N, feature_dim), dtype=jnp.float32)
    adj = jax.random.normal(k_adj, (N, N), dtype=jnp.float32)  # unused by FC

    fc1 = init_linear_params(k_fc1, feature_dim, nhid)
    fc2 = init_linear_params(k_fc2, nhid, nhid)
    prepared = prepare_fc_params((fc1, fc2))

    out = fc_module_apply(prepared, (x, adj))
    out = jax.block_until_ready(out)
    assert out.shape == (N, nhid)

    (w1, b1), (w2, b2) = fc1, fc2

    # Reference 1: exact f32 FC.forward semantics (loose tol: kernel uses bf16 MXU operands).
    h32 = jax.nn.relu(x @ w1.T + b1)
    ref32 = jax.nn.relu(h32 @ w2.T + b2 + h32)
    assert jnp.allclose(out, ref32, atol=1e-1, rtol=1e-1)

    # Reference 2: same bf16-operand / f32-accumulate precision as the kernel (tight tol).
    xb, w1b, w2b = (a.astype(jnp.bfloat16) for a in (x, w1, w2))
    hb = jax.nn.relu(jnp.dot(xb, w1b.T, preferred_element_type=jnp.float32) + b1)
    refb = jax.nn.relu(jnp.dot(hb.astype(jnp.bfloat16), w2b.T,
                               preferred_element_type=jnp.float32) + b2 + hb)
    assert jnp.allclose(out, refb, atol=2e-3, rtol=2e-3)

    print("KERNEL_OK")
</pallas_src>

<mosaic_0001>
module attributes {stable_mosaic.version = 11 : i64} {
  func.func @fc_kernel(%arg0: i32, %arg1: memref<128x32xf32, #tpu.memory_space<vmem>>, %arg2: memref<32x128xbf16, #tpu.memory_space<vmem>>, %arg3: memref<1x128xf32, #tpu.memory_space<vmem>>, %arg4: memref<128x128xbf16, #tpu.memory_space<vmem>>, %arg5: memref<1x128xf32, #tpu.memory_space<vmem>>, %arg6: memref<128x128xf32, #tpu.memory_space<vmem>>) attributes {dimension_semantics = [#tpu.dimension_semantics<parallel>], iteration_bounds = array<i64: 1>, scalar_prefetch = 0 : i64, scratch_operands = 0 : i64, tpu.core_type = #tpu.core_type<tc>, window_params = [{transform_indices = @transform_0, window_bounds = array<i64: 128, 32>}, {pipeline_mode = #tpu.pipeline_mode<synchronous>, transform_indices = @transform_1, window_bounds = array<i64: 32, 128>}, {pipeline_mode = #tpu.pipeline_mode<synchronous>, transform_indices = @transform_2, window_bounds = array<i64: 1, 128>}, {pipeline_mode = #tpu.pipeline_mode<synchronous>, transform_indices = @transform_3, window_bounds = array<i64: 128, 128>}, {pipeline_mode = #tpu.pipeline_mode<synchronous>, transform_indices = @transform_4, window_bounds = array<i64: 1, 128>}, {transform_indices = @transform_5, window_bounds = array<i64: 128, 128>}]} {
    %c0 = arith.constant 0 : index
    %c0_0 = arith.constant 0 : index
    %0 = vector.load %arg1[%c0, %c0_0] : memref<128x32xf32, #tpu.memory_space<vmem>>, vector<128x32xf32>
    %1 = arith.truncf %0 : vector<128x32xf32> to vector<128x32xbf16>
    %c0_1 = arith.constant 0 : index
    %c0_2 = arith.constant 0 : index
    %2 = vector.load %arg2[%c0_1, %c0_2] : memref<32x128xbf16, #tpu.memory_space<vmem>>, vector<32x128xbf16>
    %cst = arith.constant dense<0.000000e+00> : vector<128x128xf32>
    %3 = tpu.matmul %1, %2, %cst {dimension_numbers = #tpu.dot_dimension_numbers<[1], [0], [0], [1], [0, 0, 1, 1], [], []>} : vector<128x32xbf16>, vector<32x128xbf16>, vector<128x128xf32> -> vector<128x128xf32>
    %c0_3 = arith.constant 0 : index
    %c0_4 = arith.constant 0 : index
    %4 = vector.load %arg3[%c0_3, %c0_4] : memref<1x128xf32, #tpu.memory_space<vmem>>, vector<1x128xf32>
    %5 = vector.broadcast %4 : vector<1x128xf32> to vector<128x128xf32>
    %6 = arith.addf %3, %5 : vector<128x128xf32>
    %cst_5 = arith.constant 0.000000e+00 : f32
    %7 = vector.broadcast %cst_5 : f32 to vector<128x128xf32>
    %8 = arith.maximumf %6, %7 : vector<128x128xf32>
    %9 = arith.truncf %8 : vector<128x128xf32> to vector<128x128xbf16>
    %c0_6 = arith.constant 0 : index
    %c0_7 = arith.constant 0 : index
    %10 = vector.load %arg4[%c0_6, %c0_7] : memref<128x128xbf16, #tpu.memory_space<vmem>>, vector<128x128xbf16>
    %cst_8 = arith.constant dense<0.000000e+00> : vector<128x128xf32>
    %11 = tpu.matmul %9, %10, %cst_8 {dimension_numbers = #tpu.dot_dimension_numbers<[1], [0], [0], [1], [0, 0, 1, 1], [], []>} : vector<128x128xbf16>, vector<128x128xbf16>, vector<128x128xf32> -> vector<128x128xf32>
    %c0_9 = arith.constant 0 : index
    %c0_10 = arith.constant 0 : index
    %12 = vector.load %arg5[%c0_9, %c0_10] : memref<1x128xf32, #tpu.memory_space<vmem>>, vector<1x128xf32>
    %13 = vector.broadcast %12 : vector<1x128xf32> to vector<128x128xf32>
    %14 = arith.addf %11, %13 : vector<128x128xf32>
    %15 = arith.addf %14, %8 : vector<128x128xf32>
    %cst_11 = arith.constant 0.000000e+00 : f32
    %16 = vector.broadcast %cst_11 : f32 to vector<128x128xf32>
    %17 = arith.maximumf %15, %16 : vector<128x128xf32>
    %c0_12 = arith.constant 0 : index
    %c0_13 = arith.constant 0 : index
    %18 = vector.load %arg6[%c0_12, %c0_13] : memref<128x128xf32, #tpu.memory_space<vmem>>, vector<128x128xf32>
    tpu.vector_store %arg6[%c0_12, %c0_13], %17 {strides = array<i32>} : memref<128x128xf32, #tpu.memory_space<vmem>>, vector<128x128xf32>,
    return
  }
  func.func @transform_0(%arg0: i32) -> (i32, i32) {
    %c0_i32 = arith.constant 0 : i32
    %c0_i32_0 = arith.constant 0 : i32
    return %arg0, %c0_i32 : i32, i32
  }
  func.func @transform_1(%arg0: i32) -> (i32, i32) {
    %c0_i32 = arith.constant 0 : i32
    %c0_i32_0 = arith.constant 0 : i32
    %c0_i32_1 = arith.constant 0 : i32
    return %c0_i32, %c0_i32_0 : i32, i32
  }
  func.func @transform_2(%arg0: i32) -> (i32, i32) {
    %c0_i32 = arith.constant 0 : i32
    %c0_i32_0 = arith.constant 0 : i32
    %c0_i32_1 = arith.constant 0 : i32
    return %c0_i32, %c0_i32_0 : i32, i32
  }
  func.func @transform_3(%arg0: i32) -> (i32, i32) {
    %c0_i32 = arith.constant 0 : i32
    %c0_i32_0 = arith.constant 0 : i32
    %c0_i32_1 = arith.constant 0 : i32
    return %c0_i32, %c0_i32_0 : i32, i32
  }
  func.func @transform_4(%arg0: i32) -> (i32, i32) {
    %c0_i32 = arith.constant 0 : i32
    %c0_i32_0 = arith.constant 0 : i32
    %c0_i32_1 = arith.constant 0 : i32
    return %c0_i32, %c0_i32_0 : i32, i32
  }
  func.func @transform_5(%arg0: i32) -> (i32, i32) {
    %c0_i32 = arith.constant 0 : i32
    %c0_i32_0 = arith.constant 0 : i32
    return %arg0, %c0_i32 : i32, i32
  }
}

</mosaic_0001>

<llo_original>
// kernel: fc_forward.1
$region0: #{fc_forward.1}
  #allocation0 [shape = 'u32[]', space=smem, size = 0x4, offset = 0x4, fixed_abs, tag = 'smem constant byte address 0x4 - core index']
  #allocation1 [shape = 'u32[144,128]{1,0:T(1,128)}', space=vmem, size = 0x12000, scoped, tag = 'internal scratch']
  %s0 = inlined_call_operand.vmem [shape: f32[128,32], index: 0, kind: input, shape index: {}]
  %s1 = inlined_call_operand.vmem [shape: bf16[32,128], index: 1, kind: input, shape index: {}]
  %s2 = inlined_call_operand.vmem [shape: f32[1,128], index: 2, kind: input, shape index: {}]
  %s3 = inlined_call_operand.vmem [shape: bf16[128,128], index: 3, kind: input, shape index: {}]
  %s4 = inlined_call_operand.vmem [shape: f32[1,128], index: 4, kind: input, shape index: {}]
  %s5 = inlined_call_operand.vmem [shape: f32[128,128], index: 5, kind: output, shape index: {}]
  %s6 = sld [smem:[#allocation0]]
  $region30: #{fc_forward.1} parent=0
    _
  %s8 = ssub.s32 1, %s6
  %s9 = scalar_select 0, %s8, %s6
  // Predicated region
  $region2: #{fc_forward.1} parent=0 // pred_check
    _
  $region3: #{fc_forward.1} parent=0 // pred_check_branch
    %11 = sbr.rel (0) target = $region5
  $region4: #{fc_forward.1} parent=0 // pred_region
    _
  $region5: #{fc_forward.1} parent=0 // pred_fallthru
    _
  // Predicated region
  $region6: #{fc_forward.1} parent=0 // pred_check
    _
  $region7: #{fc_forward.1} parent=0 // pred_check_branch
    %13 = sbr.rel (0) target = $region9
  $region8: #{fc_forward.1} parent=0 // pred_region
    _
  $region9: #{fc_forward.1} parent=0 // pred_fallthru
    _
  // Predicated region
  $region10: #{fc_forward.1} parent=0 // pred_check
    _
  $region11: #{fc_forward.1} parent=0 // pred_check_branch
    %15 = sbr.rel (0) target = $region13
  $region12: #{fc_forward.1} parent=0 // pred_region
    _
  $region13: #{fc_forward.1} parent=0 // pred_fallthru
    _
  // Predicated region
  $region14: #{fc_forward.1} parent=0 // pred_check
    _
  $region15: #{fc_forward.1} parent=0 // pred_check_branch
    %17 = sbr.rel (0) target = $region17
  $region16: #{fc_forward.1} parent=0 // pred_region
    _
  $region17: #{fc_forward.1} parent=0 // pred_fallthru
    _
  // Predicated region
  $region18: #{fc_forward.1} parent=0 // pred_check
    _
  $region19: #{fc_forward.1} parent=0 // pred_check_branch
    %19 = sbr.rel (0) target = $region21
  $region20: #{fc_forward.1} parent=0 // pred_region
    _
  $region21: #{fc_forward.1} parent=0 // pred_fallthru
    _
  %v21 = vld [vmem:[%s0] sm:$0xff]
  %v22 = vld [vmem:[%s0 + $0x8] sm:$0xff]
  %v23 = vld [vmem:[%s0 + $0x10] sm:$0xff]
  %v24 = vld [vmem:[%s0 + $0x18] sm:$0xff]
  %v25 = vld [vmem:[%s0 + $0x20] sm:$0xff]
  %v26 = vld [vmem:[%s0 + $0x28] sm:$0xff]
  %v27 = vld [vmem:[%s0 + $0x30] sm:$0xff]
  %v28 = vld [vmem:[%s0 + $0x38] sm:$0xff]
  %v29 = vld [vmem:[%s0 + $0x40] sm:$0xff]
  %v30 = vld [vmem:[%s0 + $0x48] sm:$0xff]
  %v31 = vld [vmem:[%s0 + $0x50] sm:$0xff]
  %v32 = vld [vmem:[%s0 + $0x58] sm:$0xff]
  %v33 = vld [vmem:[%s0 + $0x60] sm:$0xff]
  %v34 = vld [vmem:[%s0 + $0x68] sm:$0xff]
  %v35 = vld [vmem:[%s0 + $0x70] sm:$0xff]
  %v36 = vld [vmem:[%s0 + $0x78] sm:$0xff]
  %v37 = vpack.c.bf16 %v22, %v21
  %v38 = vpack.c.bf16 %v24, %v23
  %v39 = vpack.c.bf16 %v26, %v25
  %v40 = vpack.c.bf16 %v28, %v27
  %v41 = vpack.c.bf16 %v30, %v29
  %v42 = vpack.c.bf16 %v32, %v31
  %v43 = vpack.c.bf16 %v34, %v33
  %v44 = vpack.c.bf16 %v36, %v35
  %v45 = vld [vmem:[%s1] sm:$0xf]
  %v46 = vld [vmem:[%s1 + $0x4] sm:$0xf]
  %v47 = vld [vmem:[%s1 + $0x8] sm:$0xf]
  %v48 = vld [vmem:[%s1 + $0xc] sm:$0xf]
  %v49 = vld [vmem:[%s2] sm:$0x1]
  %v51 = vlaneseq
  %v52 = vshrl.u32 %v51, 7
  %v53 = vsub.s32 0, %v52
  %v54 = vrot.slane %v49, %v53
  %v60 = vunpack.c.l.b16 %v45
  %v61 = vunpack.c.l.b16 %v46
  %v62 = vunpack.c.l.b16 %v47
  %v63 = vunpack.c.l.b16 %v48
  %v64 = vpack.c.b16 %v61, %v60
  %v65 = vpack.c.b16 %v63, %v62
  %vm68 = vcmask 261120
  %v70 = vsel %vm68, %v37, 0
  %v73 = vsel %vm68, %v38, 0
  %v76 = vsel %vm68, %v39, 0
  %v79 = vsel %vm68, %v40, 0
  %v82 = vsel %vm68, %v41, 0
  %v85 = vsel %vm68, %v42, 0
  %v88 = vsel %vm68, %v43, 0
  %v91 = vsel %vm68, %v44, 0
  %93 = vmatprep.subr.bf16.mxu0 0
  %94 = vmatpush1.bf16.msra.mxu0 %v64
  %95 = vmatprep.subr.bf16.mxu0 0
  %96 = vmatpush1.bf16.msra.mxu0 %v65
  %97 = vmatprep.subr.bf16.mxu0 0
  %98 = vmatpush1.bf16.msra.mxu0 0
  %99 = vmatprep.subr.bf16.mxu0 0
  %100 = vmatpush1.bf16.msra.mxu0 0
  %101 = vmatprep.subr.bf16.mxu0 0
  %102 = vmatpush1.bf16.msra.mxu0 0
  %103 = vmatprep.subr.bf16.mxu0 0
  %104 = vmatpush1.bf16.msra.mxu0 0
  %105 = vmatprep.subr.bf16.mxu0 0
  %106 = vmatpush1.bf16.msra.mxu0 0
  %107 = vmatprep.subr.bf16.mxu0 0
  %108 = vmatpush1.bf16.msra.mxu0 0
  %109 = vmatprep.subr.bf16.mxu0 0
  %110 = vmatpush1.bf16.msra.mxu0 0
  %111 = vmatprep.subr.bf16.mxu0 0
  %112 = vmatpush1.bf16.msra.mxu0 0
  %113 = vmatprep.subr.bf16.mxu0 0
  %114 = vmatpush1.bf16.msra.mxu0 0
  %115 = vmatprep.subr.bf16.mxu0 0
  %116 = vmatpush1.bf16.msra.mxu0 0
  %117 = vmatprep.subr.bf16.mxu0 0
  %118 = vmatpush1.bf16.msra.mxu0 0
  %119 = vmatprep.subr.bf16.mxu0 0
  %120 = vmatpush1.bf16.msra.mxu0 0
  %121 = vmatprep.subr.bf16.mxu0 0
  %122 = vmatpush1.bf16.msra.mxu0 0
  %123 = vmatprep.subr.bf16.mxu0 0
  %124 = vmatpush1.bf16.msra.mxu0 0
  %125 = vmatprep.mubr.bf16.mxu0 0
  %126 = vmatmul.mubr.bf16.gmra.mrb[0].mxu0 %v70
  %v127 = vpop.f32.mrb[0].mxu0
  %v128 = vadd.f32 %v54, %v127
  %v129 = vpop.f32.mrb[0].mxu0
  %v130 = vpop.f32.mrb[0].mxu0
  %v131 = vadd.f32 %v54, %v130
  %v132 = vpop.f32.mrb[0].mxu0
  %133 = vmatprep.mubr.bf16.mxu0 0
  %134 = vmatmul.mubr.bf16.gmra.mrb[0].mxu0 %v73
  %v135 = vpop.f32.mrb[0].mxu0
  %v136 = vadd.f32 %v54, %v135
  %v137 = vpop.f32.mrb[0].mxu0
  %v138 = vpop.f32.mrb[0].mxu0
  %v139 = vadd.f32 %v54, %v138
  %v140 = vpop.f32.mrb[0].mxu0
  %141 = vmatprep.mubr.bf16.mxu0 0
  %142 = vmatmul.mubr.bf16.gmra.mrb[0].mxu0 %v76
  %v143 = vpop.f32.mrb[0].mxu0
  %v144 = vadd.f32 %v54, %v143
  %v145 = vpop.f32.mrb[0].mxu0
  %v146 = vpop.f32.mrb[0].mxu0
  %v147 = vadd.f32 %v54, %v146
  %v148 = vpop.f32.mrb[0].mxu0
  %149 = vmatprep.mubr.bf16.mxu0 0
  %150 = vmatmul.mubr.bf16.gmra.mrb[0].mxu0 %v79
  %v151 = vpop.f32.mrb[0].mxu0
  %v152 = vadd.f32 %v54, %v151
  %v153 = vpop.f32.mrb[0].mxu0
  %v154 = vpop.f32.mrb[0].mxu0
  %v155 = vadd.f32 %v54, %v154
  %v156 = vpop.f32.mrb[0].mxu0
  %157 = vmatprep.mubr.bf16.mxu0 0
  %158 = vmatmul.mubr.bf16.gmra.mrb[0].mxu0 %v82
  %v159 = vpop.f32.mrb[0].mxu0
  %v160 = vadd.f32 %v54, %v159
  %v161 = vpop.f32.mrb[0].mxu0
  %v162 = vpop.f32.mrb[0].mxu0
  %v163 = vadd.f32 %v54, %v162
  %v164 = vpop.f32.mrb[0].mxu0
  %165 = vmatprep.mubr.bf16.mxu0 0
  %166 = vmatmul.mubr.bf16.gmra.mrb[0].mxu0 %v85
  %v167 = vpop.f32.mrb[0].mxu0
  %v168 = vadd.f32 %v54, %v167
  %v169 = vpop.f32.mrb[0].mxu0
  %v170 = vpop.f32.mrb[0].mxu0
  %v171 = vadd.f32 %v54, %v170
  %v172 = vpop.f32.mrb[0].mxu0
  %173 = vmatprep.mubr.bf16.mxu0 0
  %174 = vmatmul.mubr.bf16.gmra.mrb[0].mxu0 %v88
  %v175 = vpop.f32.mrb[0].mxu0
  %v176 = vadd.f32 %v54, %v175
  %v177 = vpop.f32.mrb[0].mxu0
  %v178 = vpop.f32.mrb[0].mxu0
  %v179 = vadd.f32 %v54, %v178
  %v180 = vpop.f32.mrb[0].mxu0
  %181 = vmatprep.mubr.bf16.mxu0 0
  %182 = vmatmul.mubr.bf16.gmra.mrb[0].mxu0 %v91
  %v183 = vpop.f32.mrb[0].mxu0
  %v184 = vadd.f32 %v54, %v183
  %v185 = vpop.f32.mrb[0].mxu0
  %v186 = vpop.f32.mrb[0].mxu0
  %v187 = vadd.f32 %v54, %v186
  %v188 = vpop.f32.mrb[0].mxu0
  %189 = vdwg.mxu0
  %v190 = vmax.f32 %v128, 0.0
  %v191 = vmax.f32 %v131, 0.0
  %v192 = vmax.f32 %v136, 0.0
  %v193 = vmax.f32 %v139, 0.0
  %v194 = vmax.f32 %v144, 0.0
  %v195 = vmax.f32 %v147, 0.0
  %v196 = vmax.f32 %v152, 0.0
  %v197 = vmax.f32 %v155, 0.0
  %v198 = vmax.f32 %v160, 0.0
  %v199 = vmax.f32 %v163, 0.0
  %v200 = vmax.f32 %v168, 0.0
  %v201 = vmax.f32 %v171, 0.0
  %v202 = vmax.f32 %v176, 0.0
  %v203 = vmax.f32 %v179, 0.0
  %v204 = vmax.f32 %v184, 0.0
  %v205 = vmax.f32 %v187, 0.0
  %v206 = vpack.c.bf16 %v191, %v190
  %v207 = vpack.c.bf16 %v193, %v192
  %v208 = vpack.c.bf16 %v195, %v194
  %v209 = vpack.c.bf16 %v197, %v196
  %v210 = vpack.c.bf16 %v199, %v198
  %v211 = vpack.c.bf16 %v201, %v200
  %v212 = vpack.c.bf16 %v203, %v202
  %v213 = vpack.c.bf16 %v205, %v204
  %v214 = vld [vmem:[%s3] sm:$0xf]
  %v215 = vld [vmem:[%s3 + $0x4] sm:$0xf]
  %v216 = vld [vmem:[%s3 + $0x8] sm:$0xf]
  %v217 = vld [vmem:[%s3 + $0xc] sm:$0xf]
  %v218 = vld [vmem:[%s3 + $0x10] sm:$0xf]
  %v219 = vld [vmem:[%s3 + $0x14] sm:$0xf]
  %v220 = vld [vmem:[%s3 + $0x18] sm:$0xf]
  %v221 = vld [vmem:[%s3 + $0x1c] sm:$0xf]
  %v222 = vld [vmem:[%s3 + $0x20] sm:$0xf]
  %v223 = vld [vmem:[%s3 + $0x24] sm:$0xf]
  %v224 = vld [vmem:[%s3 + $0x28] sm:$0xf]
  %v225 = vld [vmem:[%s3 + $0x2c] sm:$0xf]
  %v226 = vld [vmem:[%s3 + $0x30] sm:$0xf]
  %v227 = vld [vmem:[%s3 + $0x34] sm:$0xf]
  %v228 = vld [vmem:[%s3 + $0x38] sm:$0xf]
  %v229 = vld [vmem:[%s3 + $0x3c] sm:$0xf]
  %v230 = vld [vmem:[%s4] sm:$0x1]
  %v232 = vlaneseq
  %v233 = vshrl.u32 %v232, 7
  %v234 = vsub.s32 0, %v233
  %v235 = vrot.slane %v230, %v234
  %v253 = vunpack.c.l.b16 %v214
  %v254 = vunpack.c.l.b16 %v215
  %v255 = vunpack.c.l.b16 %v216
  %v256 = vunpack.c.l.b16 %v217
  %v257 = vunpack.c.l.b16 %v218
  %v258 = vunpack.c.l.b16 %v219
  %v259 = vunpack.c.l.b16 %v220
  %v260 = vunpack.c.l.b16 %v221
  %v261 = vunpack.c.l.b16 %v222
  %v262 = vunpack.c.l.b16 %v223
  %v263 = vunpack.c.l.b16 %v224
  %v264 = vunpack.c.l.b16 %v225
  %v265 = vunpack.c.l.b16 %v226
  %v266 = vunpack.c.l.b16 %v227
  %v267 = vunpack.c.l.b16 %v228
  %v268 = vunpack.c.l.b16 %v229
  %v269 = vpack.c.b16 %v254, %v253
  %v270 = vpack.c.b16 %v256, %v255
  %v271 = vpack.c.b16 %v258, %v257
  %v272 = vpack.c.b16 %v260, %v259
  %v273 = vpack.c.b16 %v262, %v261
  %v274 = vpack.c.b16 %v264, %v263
  %v275 = vpack.c.b16 %v266, %v265
  %v276 = vpack.c.b16 %v268, %v267
  %285 = vmatprep.subr.bf16.mxu0 0
  %286 = vmatpush1.bf16.msra.mxu0 %v269
  %287 = vmatprep.subr.bf16.mxu0 0
  %288 = vmatpush1.bf16.msra.mxu0 %v270
  %289 = vmatprep.subr.bf16.mxu0 0
  %290 = vmatpush1.bf16.msra.mxu0 %v271
  %291 = vmatprep.subr.bf16.mxu0 0
  %292 = vmatpush1.bf16.msra.mxu0 %v272
  %293 = vmatprep.subr.bf16.mxu0 0
  %294 = vmatpush1.bf16.msra.mxu0 %v273
  %295 = vmatprep.subr.bf16.mxu0 0
  %296 = vmatpush1.bf16.msra.mxu0 %v274
  %297 = vmatprep.subr.bf16.mxu0 0
  %298 = vmatpush1.bf16.msra.mxu0 %v275
  %299 = vmatprep.subr.bf16.mxu0 0
  %300 = vmatpush1.bf16.msra.mxu0 %v276
  %301 = vmatprep.subr.bf16.mxu0 0
  %302 = vmatpush1.bf16.msra.mxu0 0
  %303 = vmatprep.subr.bf16.mxu0 0
  %304 = vmatpush1.bf16.msra.mxu0 0
  %305 = vmatprep.subr.bf16.mxu0 0
  %306 = vmatpush1.bf16.msra.mxu0 0
  %307 = vmatprep.subr.bf16.mxu0 0
  %308 = vmatpush1.bf16.msra.mxu0 0
  %309 = vmatprep.subr.bf16.mxu0 0
  %310 = vmatpush1.bf16.msra.mxu0 0
  %311 = vmatprep.subr.bf16.mxu0 0
  %312 = vmatpush1.bf16.msra.mxu0 0
  %313 = vmatprep.subr.bf16.mxu0 0
  %314 = vmatpush1.bf16.msra.mxu0 0
  %315 = vmatprep.subr.bf16.mxu0 0
  %316 = vmatpush1.bf16.msra.mxu0 0
  %317 = vmatprep.mubr.bf16.mxu0 0
  %318 = vmatmul.mubr.bf16.gmra.mrb[0].mxu0 %v206
  %v319 = vpop.f32.mrb[0].mxu0
  %v320 = vadd.f32 %v235, %v319
  %v321 = vpop.f32.mrb[0].mxu0
  %v322 = vpop.f32.mrb[0].mxu0
  %v323 = vadd.f32 %v235, %v322
  %v324 = vpop.f32.mrb[0].mxu0
  %325 = vmatprep.mubr.bf16.mxu0 0
  %326 = vmatmul.mubr.bf16.gmra.mrb[0].mxu0 %v207
  %v327 = vpop.f32.mrb[0].mxu0
  %v328 = vadd.f32 %v235, %v327
  %v329 = vpop.f32.mrb[0].mxu0
  %v330 = vpop.f32.mrb[0].mxu0
  %v331 = vadd.f32 %v235, %v330
  %v332 = vpop.f32.mrb[0].mxu0
  %333 = vmatprep.mubr.bf16.mxu0 0
  %334 = vmatmul.mubr.bf16.gmra.mrb[0].mxu0 %v208
  %v335 = vpop.f32.mrb[0].mxu0
  %v336 = vadd.f32 %v235, %v335
  %v337 = vpop.f32.mrb[0].mxu0
  %v338 = vpop.f32.mrb[0].mxu0
  %v339 = vadd.f32 %v235, %v338
  %v340 = vpop.f32.mrb[0].mxu0
  %341 = vmatprep.mubr.bf16.mxu0 0
  %342 = vmatmul.mubr.bf16.gmra.mrb[0].mxu0 %v209
  %v343 = vpop.f32.mrb[0].mxu0
  %v344 = vadd.f32 %v235, %v343
  %v345 = vpop.f32.mrb[0].mxu0
  %v346 = vpop.f32.mrb[0].mxu0
  %v347 = vadd.f32 %v235, %v346
  %v348 = vpop.f32.mrb[0].mxu0
  %349 = vmatprep.mubr.bf16.mxu0 0
  %350 = vmatmul.mubr.bf16.gmra.mrb[0].mxu0 %v210
  %v351 = vpop.f32.mrb[0].mxu0
  %v352 = vadd.f32 %v235, %v351
  %v353 = vpop.f32.mrb[0].mxu0
  %v354 = vpop.f32.mrb[0].mxu0
  %v355 = vadd.f32 %v235, %v354
  %v356 = vpop.f32.mrb[0].mxu0
  %357 = vmatprep.mubr.bf16.mxu0 0
  %358 = vmatmul.mubr.bf16.gmra.mrb[0].mxu0 %v211
  %v359 = vpop.f32.mrb[0].mxu0
  %v360 = vadd.f32 %v235, %v359
  %v361 = vpop.f32.mrb[0].mxu0
  %v362 = vpop.f32.mrb[0].mxu0
  %v363 = vadd.f32 %v235, %v362
  %v364 = vpop.f32.mrb[0].mxu0
  %365 = vmatprep.mubr.bf16.mxu0 0
  %366 = vmatmul.mubr.bf16.gmra.mrb[0].mxu0 %v212
  %v367 = vpop.f32.mrb[0].mxu0
  %v368 = vadd.f32 %v235, %v367
  %v369 = vpop.f32.mrb[0].mxu0
  %v370 = vpop.f32.mrb[0].mxu0
  %v371 = vadd.f32 %v235, %v370
  %v372 = vpop.f32.mrb[0].mxu0
  %373 = vmatprep.mubr.bf16.mxu0 0
  %374 = vmatmul.mubr.bf16.gmra.mrb[0].mxu0 %v213
  %v375 = vpop.f32.mrb[0].mxu0
  %v376 = vadd.f32 %v235, %v375
  %v377 = vpop.f32.mrb[0].mxu0
  %v378 = vpop.f32.mrb[0].mxu0
  %v379 = vadd.f32 %v235, %v378
  %v380 = vpop.f32.mrb[0].mxu0
  %381 = vdwg.mxu0
  %v382 = vadd.f32 %v320, %v190
  %v383 = vadd.f32 %v323, %v191
  %v384 = vadd.f32 %v328, %v192
  %v385 = vadd.f32 %v331, %v193
  %v386 = vadd.f32 %v336, %v194
  %v387 = vadd.f32 %v339, %v195
  %v388 = vadd.f32 %v344, %v196
  %v389 = vadd.f32 %v347, %v197
  %v390 = vadd.f32 %v352, %v198
  %v391 = vadd.f32 %v355, %v199
  %v392 = vadd.f32 %v360, %v200
  %v393 = vadd.f32 %v363, %v201
  %v394 = vadd.f32 %v368, %v202
  %v395 = vadd.f32 %v371, %v203
  %v396 = vadd.f32 %v376, %v204
  %v397 = vadd.f32 %v379, %v205
  %v398 = vmax.f32 %v382, 0.0
  %v399 = vmax.f32 %v383, 0.0
  %v400 = vmax.f32 %v384, 0.0
  %v401 = vmax.f32 %v385, 0.0
  %v402 = vmax.f32 %v386, 0.0
  %v403 = vmax.f32 %v387, 0.0
  %v404 = vmax.f32 %v388, 0.0
  %v405 = vmax.f32 %v389, 0.0
  %v406 = vmax.f32 %v390, 0.0
  %v407 = vmax.f32 %v391, 0.0
  %v408 = vmax.f32 %v392, 0.0
  %v409 = vmax.f32 %v393, 0.0
  %v410 = vmax.f32 %v394, 0.0
  %v411 = vmax.f32 %v395, 0.0
  %v412 = vmax.f32 %v396, 0.0
  %v413 = vmax.f32 %v397, 0.0
  %414 = vst [vmem:[%s5] sm:$0xff] %v398
  %415 = vst [vmem:[%s5 + $0x8] sm:$0xff] %v399
  %416 = vst [vmem:[%s5 + $0x10] sm:$0xff] %v400
  %417 = vst [vmem:[%s5 + $0x18] sm:$0xff] %v401
  %418 = vst [vmem:[%s5 + $0x20] sm:$0xff] %v402
  %419 = vst [vmem:[%s5 + $0x28] sm:$0xff] %v403
  %420 = vst [vmem:[%s5 + $0x30] sm:$0xff] %v404
  %421 = vst [vmem:[%s5 + $0x38] sm:$0xff] %v405
  %422 = vst [vmem:[%s5 + $0x40] sm:$0xff] %v406
  %423 = vst [vmem:[%s5 + $0x48] sm:$0xff] %v407
  %424 = vst [vmem:[%s5 + $0x50] sm:$0xff] %v408
  %425 = vst [vmem:[%s5 + $0x58] sm:$0xff] %v409
  %426 = vst [vmem:[%s5 + $0x60] sm:$0xff] %v410
  %427 = vst [vmem:[%s5 + $0x68] sm:$0xff] %v411
  %428 = vst [vmem:[%s5 + $0x70] sm:$0xff] %v412
  %429 = vst [vmem:[%s5 + $0x78] sm:$0xff] %v413
  // Predicated region
  $region22: #{fc_forward.1} parent=0 // pred_check
    _
  $region23: #{fc_forward.1} parent=0 // pred_check_branch
    %431 = sbr.rel (0) target = $region25
  $region24: #{fc_forward.1} parent=0 // pred_region
    _
  $region25: #{fc_forward.1} parent=0 // pred_fallthru
    _
  // Predicated region
  $region26: #{fc_forward.1} parent=0 // pred_check
    _
  $region27: #{fc_forward.1} parent=0 // pred_check_branch
    %433 = sbr.rel (0) target = $region29
  $region28: #{fc_forward.1} parent=0 // pred_region
    _
  $region29: #{fc_forward.1} parent=0 // pred_fallthru
    _

</llo_original>
